<compile_context>
chip_gen: v7x
topology: tpu7x:2x2x1
jax: 0.10.0
libtpu: 0.0.40
codegen_flags: <defaults>
</compile_context>

<pallas_src>
import jax
import jax.numpy as jnp
from jax.experimental import pallas as pl
from jax.experimental.pallas import tpu as pltpu

_LANES = 128          # TPU lane width
_BLOCK_BATCH = 256    # batch tile (rows per grid step)


def _round_up(n, m):
    return ((n + m - 1) // m) * m


def qnet_kernel(x_ref, w1_ref, b1_ref, w2_ref, b2_ref, w3_ref, b3_ref, o_ref):
    x = x_ref[...]                      # (TB, F)  float32
    w1 = w1_ref[...]                    # (F, H)   float32

    # --- fc1 + ReLU on the VPU: K = F is tiny (4); the MXU would be mostly
    #     padding for this push, and the VPU is otherwise idle here.
    acc = x[:, 0:1] * w1[0:1, :] + b1_ref[...]
    for k in range(1, x.shape[1]):      # static, tiny trip count
        acc = acc + x[:, k:k + 1] * w1[k:k + 1, :]
    h1 = jnp.maximum(acc, 0.0)

    # --- fc2 + ReLU on the MXU: bf16 inputs, f32 accumulation.
    h2 = jnp.dot(h1.astype(jnp.bfloat16), w2_ref[...],
                 preferred_element_type=jnp.float32)
    h2 = jnp.maximum(h2 + b2_ref[...], 0.0)

    # --- fc3 (output lane-padded to 128 columns), no activation.
    out = jnp.dot(h2.astype(jnp.bfloat16), w3_ref[...],
                  preferred_element_type=jnp.float32)
    o_ref[...] = (out + b3_ref[...]).astype(o_ref.dtype)


def qnet_forward(x, params):
    """x: (B, n_features) float32. params: dict from init_params (float32)."""
    w1, b1 = params["w1"], params["b1"]
    w2, b2 = params["w2"], params["b2"]
    w3, b3 = params["w3"], params["b3"]

    B, F = x.shape
    H = w1.shape[1]
    n_actions = w3.shape[1]

    # Lane-pad the output head to 128 columns (zero columns -> zero outputs,
    # avoids masked partial stores on a 2-wide last dim).
    n_out_pad = _round_up(n_actions, _LANES)
    w3p = jnp.zeros((H, n_out_pad), w3.dtype).at[:, :n_actions].set(w3)
    b3p = jnp.zeros((1, n_out_pad), b3.dtype).at[:, :n_actions].set(b3)

    # bf16 weights for the MXU matmuls (f32 accumulation in-kernel).
    w2_bf = w2.astype(jnp.bfloat16)
    w3p_bf = w3p.astype(jnp.bfloat16)

    # Batch tiling: sublane-aligned, O(TB) VMEM regardless of B.
    b_pad = _round_up(B, 8)
    tb = b_pad if b_pad <= _BLOCK_BATCH else _BLOCK_BATCH
    b_pad = _round_up(b_pad, tb)
    if b_pad != B:
        x = jnp.pad(x, ((0, b_pad - B), (0, 0)))

    grid = (b_pad // tb,)

    flops = 2 * b_pad * (F * H + H * H + H * n_out_pad)
    bytes_accessed = (x.size * 4 + w1.size * 4 + b1.size * 4
                      + w2_bf.size * 2 + b2.size * 4
                      + w3p_bf.size * 2 + b3p.size * 4
                      + b_pad * n_out_pad * 4)

    out = pl.pallas_call(
        qnet_kernel,
        out_shape=jax.ShapeDtypeStruct((b_pad, n_out_pad), jnp.float32),
        grid=grid,
        in_specs=[
            pl.BlockSpec((tb, F), lambda i: (i, 0)),          # x: tiled over batch
            pl.BlockSpec((F, H), lambda i: (0, 0)),           # w1 (VMEM-resident)
            pl.BlockSpec((1, H), lambda i: (0, 0)),           # b1
            pl.BlockSpec((H, H), lambda i: (0, 0)),           # w2 (bf16)
            pl.BlockSpec((1, H), lambda i: (0, 0)),           # b2
            pl.BlockSpec((H, n_out_pad), lambda i: (0, 0)),   # w3 (bf16, padded)
            pl.BlockSpec((1, n_out_pad), lambda i: (0, 0)),   # b3 (padded)
        ],
        out_specs=pl.BlockSpec((tb, n_out_pad), lambda i: (i, 0)),
        compiler_params=pltpu.CompilerParams(
            dimension_semantics=("parallel",)),
        cost_estimate=pl.CostEstimate(
            flops=flops, transcendentals=0, bytes_accessed=bytes_accessed),
    )(x, w1, b1, w2_bf, b2, w3p_bf, b3p)

    return out[:B, :n_actions]


def init_params(key, n_features=4, n_actions=2, hidden=128):
    """Deterministic init mimicking nn.Linear's uniform(-1/sqrt(fan_in), +)."""
    ks = jax.random.split(key, 6)

    def linear(kw, kb, fan_in, fan_out):
        bound = 1.0 / jnp.sqrt(jnp.float32(fan_in))
        w = jax.random.uniform(kw, (fan_in, fan_out), jnp.float32, -bound, bound)
        b = jax.random.uniform(kb, (1, fan_out), jnp.float32, -bound, bound)
        return w, b

    w1, b1 = linear(ks[0], ks[1], n_features, hidden)
    w2, b2 = linear(ks[2], ks[3], hidden, hidden)
    w3, b3 = linear(ks[4], ks[5], hidden, n_actions)
    return {"w1": w1, "b1": b1, "w2": w2, "b2": b2, "w3": w3, "b3": b3}


def qnet_reference(x, params):
    h1 = jnp.maximum(x @ params["w1"] + params["b1"], 0.0)
    h2 = jnp.maximum(h1 @ params["w2"] + params["b2"], 0.0)
    return h2 @ params["w3"] + params["b3"]


if __name__ == "__main__":
    key = jax.random.PRNGKey(0)
    k_param, k_x = jax.random.split(key)

    n_features, n_actions, batch = 4, 2, 8
    params = init_params(k_param, n_features=n_features, n_actions=n_actions)

    # Example CartPole-style observations, batch of 8.
    x = jax.random.normal(k_x, (batch, n_features), jnp.float32)

    out = jax.jit(qnet_forward)(x, params)
    out = jax.block_until_ready(out)

    ref = qnet_reference(x, params)
    assert out.shape == (batch, n_actions)
    # bf16 MXU matmuls vs. f32 reference -> relaxed tolerance (expected).
    assert jnp.allclose(out, ref, atol=2e-2, rtol=2e-2), float(
        jnp.max(jnp.abs(out - ref)))

    print("KERNEL_OK")
</pallas_src>

<mosaic_0001>
module attributes {stable_mosaic.version = 11 : i64} {
  func.func @qnet_kernel(%arg0: i32, %arg1: memref<8x4xf32, #tpu.memory_space<vmem>>, %arg2: memref<4x128xf32, #tpu.memory_space<vmem>>, %arg3: memref<1x128xf32, #tpu.memory_space<vmem>>, %arg4: memref<128x128xbf16, #tpu.memory_space<vmem>>, %arg5: memref<1x128xf32, #tpu.memory_space<vmem>>, %arg6: memref<128x128xbf16, #tpu.memory_space<vmem>>, %arg7: memref<1x128xf32, #tpu.memory_space<vmem>>, %arg8: memref<8x128xf32, #tpu.memory_space<vmem>>) attributes {dimension_semantics = [#tpu.dimension_semantics<parallel>], iteration_bounds = array<i64: 1>, scalar_prefetch = 0 : i64, scratch_operands = 0 : i64, tpu.core_type = #tpu.core_type<tc>, window_params = [{transform_indices = @transform_0, window_bounds = array<i64: 8, 4>}, {pipeline_mode = #tpu.pipeline_mode<synchronous>, transform_indices = @transform_1, window_bounds = array<i64: 4, 128>}, {pipeline_mode = #tpu.pipeline_mode<synchronous>, transform_indices = @transform_2, window_bounds = array<i64: 1, 128>}, {pipeline_mode = #tpu.pipeline_mode<synchronous>, transform_indices = @transform_3, window_bounds = array<i64: 128, 128>}, {pipeline_mode = #tpu.pipeline_mode<synchronous>, transform_indices = @transform_4, window_bounds = array<i64: 1, 128>}, {pipeline_mode = #tpu.pipeline_mode<synchronous>, transform_indices = @transform_5, window_bounds = array<i64: 128, 128>}, {pipeline_mode = #tpu.pipeline_mode<synchronous>, transform_indices = @transform_6, window_bounds = array<i64: 1, 128>}, {transform_indices = @transform_7, window_bounds = array<i64: 8, 128>}]} {
    %c0 = arith.constant 0 : index
    %c0_0 = arith.constant 0 : index
    %0 = vector.load %arg1[%c0, %c0_0] : memref<8x4xf32, #tpu.memory_space<vmem>>, vector<8x4xf32>
    %c0_1 = arith.constant 0 : index
    %c0_2 = arith.constant 0 : index
    %1 = vector.load %arg2[%c0_1, %c0_2] : memref<4x128xf32, #tpu.memory_space<vmem>>, vector<4x128xf32>
    %2 = vector.extract_strided_slice %0 {offsets = [0, 0], sizes = [8, 1], strides = [1, 1]} : vector<8x4xf32> to vector<8x1xf32>
    %3 = vector.extract_strided_slice %1 {offsets = [0, 0], sizes = [1, 128], strides = [1, 1]} : vector<4x128xf32> to vector<1x128xf32>
    %4 = vector.broadcast %2 : vector<8x1xf32> to vector<8x128xf32>
    %5 = vector.broadcast %3 : vector<1x128xf32> to vector<8x128xf32>
    %6 = arith.mulf %4, %5 : vector<8x128xf32>
    %c0_3 = arith.constant 0 : index
    %c0_4 = arith.constant 0 : index
    %7 = vector.load %arg3[%c0_3, %c0_4] : memref<1x128xf32, #tpu.memory_space<vmem>>, vector<1x128xf32>
    %8 = vector.broadcast %7 : vector<1x128xf32> to vector<8x128xf32>
    %9 = arith.addf %6, %8 : vector<8x128xf32>
    %10 = vector.extract_strided_slice %0 {offsets = [0, 1], sizes = [8, 1], strides = [1, 1]} : vector<8x4xf32> to vector<8x1xf32>
    %11 = vector.extract_strided_slice %1 {offsets = [1, 0], sizes = [1, 128], strides = [1, 1]} : vector<4x128xf32> to vector<1x128xf32>
    %12 = vector.broadcast %10 : vector<8x1xf32> to vector<8x128xf32>
    %13 = vector.broadcast %11 : vector<1x128xf32> to vector<8x128xf32>
    %14 = arith.mulf %12, %13 : vector<8x128xf32>
    %15 = arith.addf %9, %14 : vector<8x128xf32>
    %16 = vector.extract_strided_slice %0 {offsets = [0, 2], sizes = [8, 1], strides = [1, 1]} : vector<8x4xf32> to vector<8x1xf32>
    %17 = vector.extract_strided_slice %1 {offsets = [2, 0], sizes = [1, 128], strides = [1, 1]} : vector<4x128xf32> to vector<1x128xf32>
    %18 = vector.broadcast %16 : vector<8x1xf32> to vector<8x128xf32>
    %19 = vector.broadcast %17 : vector<1x128xf32> to vector<8x128xf32>
    %20 = arith.mulf %18, %19 : vector<8x128xf32>
    %21 = arith.addf %15, %20 : vector<8x128xf32>
    %22 = vector.extract_strided_slice %0 {offsets = [0, 3], sizes = [8, 1], strides = [1, 1]} : vector<8x4xf32> to vector<8x1xf32>
    %23 = vector.extract_strided_slice %1 {offsets = [3, 0], sizes = [1, 128], strides = [1, 1]} : vector<4x128xf32> to vector<1x128xf32>
    %24 = vector.broadcast %22 : vector<8x1xf32> to vector<8x128xf32>
    %25 = vector.broadcast %23 : vector<1x128xf32> to vector<8x128xf32>
    %26 = arith.mulf %24, %25 : vector<8x128xf32>
    %27 = arith.addf %21, %26 : vector<8x128xf32>
    %cst = arith.constant 0.000000e+00 : f32
    %28 = vector.broadcast %cst : f32 to vector<8x128xf32>
    %29 = arith.maximumf %27, %28 : vector<8x128xf32>
    %30 = arith.truncf %29 : vector<8x128xf32> to vector<8x128xbf16>
    %c0_5 = arith.constant 0 : index
    %c0_6 = arith.constant 0 : index
    %31 = vector.load %arg4[%c0_5, %c0_6] : memref<128x128xbf16, #tpu.memory_space<vmem>>, vector<128x128xbf16>
    %cst_7 = arith.constant dense<0.000000e+00> : vector<8x128xf32>
    %32 = tpu.matmul %30, %31, %cst_7 {dimension_numbers = #tpu.dot_dimension_numbers<[1], [0], [0], [1], [0, 0, 1, 1], [], []>} : vector<8x128xbf16>, vector<128x128xbf16>, vector<8x128xf32> -> vector<8x128xf32>
    %c0_8 = arith.constant 0 : index
    %c0_9 = arith.constant 0 : index
    %33 = vector.load %arg5[%c0_8, %c0_9] : memref<1x128xf32, #tpu.memory_space<vmem>>, vector<1x128xf32>
    %34 = vector.broadcast %33 : vector<1x128xf32> to vector<8x128xf32>
    %35 = arith.addf %32, %34 : vector<8x128xf32>
    %cst_10 = arith.constant 0.000000e+00 : f32
    %36 = vector.broadcast %cst_10 : f32 to vector<8x128xf32>
    %37 = arith.maximumf %35, %36 : vector<8x128xf32>
    %38 = arith.truncf %37 : vector<8x128xf32> to vector<8x128xbf16>
    %c0_11 = arith.constant 0 : index
    %c0_12 = arith.constant 0 : index
    %39 = vector.load %arg6[%c0_11, %c0_12] : memref<128x128xbf16, #tpu.memory_space<vmem>>, vector<128x128xbf16>
    %cst_13 = arith.constant dense<0.000000e+00> : vector<8x128xf32>
    %40 = tpu.matmul %38, %39, %cst_13 {dimension_numbers = #tpu.dot_dimension_numbers<[1], [0], [0], [1], [0, 0, 1, 1], [], []>} : vector<8x128xbf16>, vector<128x128xbf16>, vector<8x128xf32> -> vector<8x128xf32>
    %c0_14 = arith.constant 0 : index
    %c0_15 = arith.constant 0 : index
    %41 = vector.load %arg7[%c0_14, %c0_15] : memref<1x128xf32, #tpu.memory_space<vmem>>, vector<1x128xf32>
    %42 = vector.broadcast %41 : vector<1x128xf32> to vector<8x128xf32>
    %43 = arith.addf %40, %42 : vector<8x128xf32>
    %c0_16 = arith.constant 0 : index
    %c0_17 = arith.constant 0 : index
    %44 = vector.load %arg8[%c0_16, %c0_17] : memref<8x128xf32, #tpu.memory_space<vmem>>, vector<8x128xf32>
    tpu.vector_store %arg8[%c0_16, %c0_17], %43 {strides = array<i32>} : memref<8x128xf32, #tpu.memory_space<vmem>>, vector<8x128xf32>,
    return
  }
  func.func @transform_0(%arg0: i32) -> (i32, i32) {
    %c0_i32 = arith.constant 0 : i32
    %c0_i32_0 = arith.constant 0 : i32
    return %arg0, %c0_i32 : i32, i32
  }
  func.func @transform_1(%arg0: i32) -> (i32, i32) {
    %c0_i32 = arith.constant 0 : i32
    %c0_i32_0 = arith.constant 0 : i32
    %c0_i32_1 = arith.constant 0 : i32
    return %c0_i32, %c0_i32_0 : i32, i32
  }
  func.func @transform_2(%arg0: i32) -> (i32, i32) {
    %c0_i32 = arith.constant 0 : i32
    %c0_i32_0 = arith.constant 0 : i32
    %c0_i32_1 = arith.constant 0 : i32
    return %c0_i32, %c0_i32_0 : i32, i32
  }
  func.func @transform_3(%arg0: i32) -> (i32, i32) {
    %c0_i32 = arith.constant 0 : i32
    %c0_i32_0 = arith.constant 0 : i32
    %c0_i32_1 = arith.constant 0 : i32
    return %c0_i32, %c0_i32_0 : i32, i32
  }
  func.func @transform_4(%arg0: i32) -> (i32, i32) {
    %c0_i32 = arith.constant 0 : i32
    %c0_i32_0 = arith.constant 0 : i32
    %c0_i32_1 = arith.constant 0 : i32
    return %c0_i32, %c0_i32_0 : i32, i32
  }
  func.func @transform_5(%arg0: i32) -> (i32, i32) {
    %c0_i32 = arith.constant 0 : i32
    %c0_i32_0 = arith.constant 0 : i32
    %c0_i32_1 = arith.constant 0 : i32
    return %c0_i32, %c0_i32_0 : i32, i32
  }
  func.func @transform_6(%arg0: i32) -> (i32, i32) {
    %c0_i32 = arith.constant 0 : i32
    %c0_i32_0 = arith.constant 0 : i32
    %c0_i32_1 = arith.constant 0 : i32
    return %c0_i32, %c0_i32_0 : i32, i32
  }
  func.func @transform_7(%arg0: i32) -> (i32, i32) {
    %c0_i32 = arith.constant 0 : i32
    %c0_i32_0 = arith.constant 0 : i32
    return %arg0, %c0_i32 : i32, i32
  }
}

</mosaic_0001>

<llo_original>
// kernel: qnet_forward.1
$region0: #{qnet_forward.1}
  #allocation0 [shape = 'u32[]', space=smem, size = 0x4, offset = 0x4, fixed_abs, tag = 'smem constant byte address 0x4 - core index']
  #allocation1 [shape = 'u32[144,128]{1,0:T(1,128)}', space=vmem, size = 0x12000, scoped, tag = 'internal scratch']
  %s0 = inlined_call_operand.vmem [shape: f32[8,4], index: 0, kind: input, shape index: {}]
  %s1 = inlined_call_operand.vmem [shape: f32[4,128], index: 1, kind: input, shape index: {}]
  %s2 = inlined_call_operand.vmem [shape: f32[1,128], index: 2, kind: input, shape index: {}]
  %s3 = inlined_call_operand.vmem [shape: bf16[128,128], index: 3, kind: input, shape index: {}]
  %s4 = inlined_call_operand.vmem [shape: f32[1,128], index: 4, kind: input, shape index: {}]
  %s5 = inlined_call_operand.vmem [shape: bf16[128,128], index: 5, kind: input, shape index: {}]
  %s6 = inlined_call_operand.vmem [shape: f32[1,128], index: 6, kind: input, shape index: {}]
  %s7 = inlined_call_operand.vmem [shape: f32[8,128], index: 7, kind: output, shape index: {}]
  %s8 = sld [smem:[#allocation0]]
  $region38: #{qnet_forward.1} parent=0
    _
  %s10 = ssub.s32 1, %s8
  %s11 = scalar_select 0, %s10, %s8
  // Predicated region
  $region2: #{qnet_forward.1} parent=0 // pred_check
    _
  $region3: #{qnet_forward.1} parent=0 // pred_check_branch
    %13 = sbr.rel (0) target = $region5
  $region4: #{qnet_forward.1} parent=0 // pred_region
    _
  $region5: #{qnet_forward.1} parent=0 // pred_fallthru
    _
  // Predicated region
  $region6: #{qnet_forward.1} parent=0 // pred_check
    _
  $region7: #{qnet_forward.1} parent=0 // pred_check_branch
    %15 = sbr.rel (0) target = $region9
  $region8: #{qnet_forward.1} parent=0 // pred_region
    _
  $region9: #{qnet_forward.1} parent=0 // pred_fallthru
    _
  // Predicated region
  $region10: #{qnet_forward.1} parent=0 // pred_check
    _
  $region11: #{qnet_forward.1} parent=0 // pred_check_branch
    %17 = sbr.rel (0) target = $region13
  $region12: #{qnet_forward.1} parent=0 // pred_region
    _
  $region13: #{qnet_forward.1} parent=0 // pred_fallthru
    _
  // Predicated region
  $region14: #{qnet_forward.1} parent=0 // pred_check
    _
  $region15: #{qnet_forward.1} parent=0 // pred_check_branch
    %19 = sbr.rel (0) target = $region17
  $region16: #{qnet_forward.1} parent=0 // pred_region
    _
  $region17: #{qnet_forward.1} parent=0 // pred_fallthru
    _
  // Predicated region
  $region18: #{qnet_forward.1} parent=0 // pred_check
    _
  $region19: #{qnet_forward.1} parent=0 // pred_check_branch
    %21 = sbr.rel (0) target = $region21
  $region20: #{qnet_forward.1} parent=0 // pred_region
    _
  $region21: #{qnet_forward.1} parent=0 // pred_fallthru
    _
  // Predicated region
  $region22: #{qnet_forward.1} parent=0 // pred_check
    _
  $region23: #{qnet_forward.1} parent=0 // pred_check_branch
    %23 = sbr.rel (0) target = $region25
  $region24: #{qnet_forward.1} parent=0 // pred_region
    _
  $region25: #{qnet_forward.1} parent=0 // pred_fallthru
    _
  // Predicated region
  $region26: #{qnet_forward.1} parent=0 // pred_check
    _
  $region27: #{qnet_forward.1} parent=0 // pred_check_branch
    %25 = sbr.rel (0) target = $region29
  $region28: #{qnet_forward.1} parent=0 // pred_region
    _
  $region29: #{qnet_forward.1} parent=0 // pred_fallthru
    _
  %v27 = vld [vmem:[%s0] sm:$0xff]
  %v28 = vld [vmem:[%s1] sm:$0xf]
  %30 = vset.pattern.permute.xlu0 0
  %31 = vperm.xlu0 %30, %v27
  %v32 = vpop.permute.xlu0 %31
  %v34 = vlaneseq
  %v35 = vshrl.u32 %v34, 7
  %v36 = vsub.s32 0, %v35
  %v37 = vrot.slane %v28, %v36
  %v38 = vmul.f32 %v32, %v37
  %v39 = vld [vmem:[%s2] sm:$0x1]
  %v41 = vlaneseq
  %v42 = vshrl.u32 %v41, 7
  %v43 = vsub.s32 0, %v42
  %v44 = vrot.slane %v39, %v43
  %v46 = vadd.f32 %v38, %v44
  %47 = vset.pattern.permute.xlu0 1
  %48 = vperm.xlu0 %47, %v27
  %v49 = vpop.permute.xlu0 %48
  %v51 = vlaneseq
  %v52 = vshrl.u32 %v51, 7
  %v53 = vsub.s32 1, %v52
  %v54 = vrot.slane %v28, %v53
  %v55 = vmul.f32 %v49, %v54
  %v56 = vadd.f32 %v46, %v55
  %57 = vset.pattern.permute.xlu0 2
  %58 = vperm.xlu0 %57, %v27
  %v59 = vpop.permute.xlu0 %58
  %v61 = vlaneseq
  %v62 = vshrl.u32 %v61, 7
  %v63 = vsub.s32 2, %v62
  %v64 = vrot.slane %v28, %v63
  %v65 = vmul.f32 %v59, %v64
  %v66 = vadd.f32 %v56, %v65
  %67 = vset.pattern.permute.xlu0 3
  %68 = vperm.xlu0 %67, %v27
  %v69 = vpop.permute.xlu0 %68
  %v71 = vlaneseq
  %v72 = vshrl.u32 %v71, 7
  %v73 = vsub.s32 3, %v72
  %v74 = vrot.slane %v28, %v73
  %v75 = vmul.f32 %v69, %v74
  %v76 = vadd.f32 %v66, %v75
  %v77 = vmax.f32 %v76, 0.0
  %v78 = vpack.c.bf16 %v77, %v77
  %v79 = vld [vmem:[%s3] sm:$0xf]
  %v80 = vld [vmem:[%s3 + $0x4] sm:$0xf]
  %v81 = vld [vmem:[%s3 + $0x8] sm:$0xf]
  %v82 = vld [vmem:[%s3 + $0xc] sm:$0xf]
  %v83 = vld [vmem:[%s3 + $0x10] sm:$0xf]
  %v84 = vld [vmem:[%s3 + $0x14] sm:$0xf]
  %v85 = vld [vmem:[%s3 + $0x18] sm:$0xf]
  %v86 = vld [vmem:[%s3 + $0x1c] sm:$0xf]
  %v87 = vld [vmem:[%s3 + $0x20] sm:$0xf]
  %v88 = vld [vmem:[%s3 + $0x24] sm:$0xf]
  %v89 = vld [vmem:[%s3 + $0x28] sm:$0xf]
  %v90 = vld [vmem:[%s3 + $0x2c] sm:$0xf]
  %v91 = vld [vmem:[%s3 + $0x30] sm:$0xf]
  %v92 = vld [vmem:[%s3 + $0x34] sm:$0xf]
  %v93 = vld [vmem:[%s3 + $0x38] sm:$0xf]
  %v94 = vld [vmem:[%s3 + $0x3c] sm:$0xf]
  %v95 = vld [vmem:[%s4] sm:$0x1]
  %v97 = vlaneseq
  %v98 = vshrl.u32 %v97, 7
  %v99 = vsub.s32 0, %v98
  %v100 = vrot.slane %v95, %v99
  %v118 = vunpack.c.l.b16 %v79
  %v119 = vunpack.c.l.b16 %v80
  %v120 = vunpack.c.l.b16 %v81
  %v121 = vunpack.c.l.b16 %v82
  %v122 = vunpack.c.l.b16 %v83
  %v123 = vunpack.c.l.b16 %v84
  %v124 = vunpack.c.l.b16 %v85
  %v125 = vunpack.c.l.b16 %v86
  %v126 = vunpack.c.l.b16 %v87
  %v127 = vunpack.c.l.b16 %v88
  %v128 = vunpack.c.l.b16 %v89
  %v129 = vunpack.c.l.b16 %v90
  %v130 = vunpack.c.l.b16 %v91
  %v131 = vunpack.c.l.b16 %v92
  %v132 = vunpack.c.l.b16 %v93
  %v133 = vunpack.c.l.b16 %v94
  %v134 = vpack.c.b16 %v119, %v118
  %v135 = vpack.c.b16 %v121, %v120
  %v136 = vpack.c.b16 %v123, %v122
  %v137 = vpack.c.b16 %v125, %v124
  %v138 = vpack.c.b16 %v127, %v126
  %v139 = vpack.c.b16 %v129, %v128
  %v140 = vpack.c.b16 %v131, %v130
  %v141 = vpack.c.b16 %v133, %v132
  %150 = vmatprep.subr.bf16.mxu0 0
  %151 = vmatpush1.bf16.msra.mxu0 %v134
  %152 = vmatprep.subr.bf16.mxu0 0
  %153 = vmatpush1.bf16.msra.mxu0 %v135
  %154 = vmatprep.subr.bf16.mxu0 0
  %155 = vmatpush1.bf16.msra.mxu0 %v136
  %156 = vmatprep.subr.bf16.mxu0 0
  %157 = vmatpush1.bf16.msra.mxu0 %v137
  %158 = vmatprep.subr.bf16.mxu0 0
  %159 = vmatpush1.bf16.msra.mxu0 %v138
  %160 = vmatprep.subr.bf16.mxu0 0
  %161 = vmatpush1.bf16.msra.mxu0 %v139
  %162 = vmatprep.subr.bf16.mxu0 0
  %163 = vmatpush1.bf16.msra.mxu0 %v140
  %164 = vmatprep.subr.bf16.mxu0 0
  %165 = vmatpush1.bf16.msra.mxu0 %v141
  %166 = vmatprep.subr.bf16.mxu0 0
  %167 = vmatpush1.bf16.msra.mxu0 0
  %168 = vmatprep.subr.bf16.mxu0 0
  %169 = vmatpush1.bf16.msra.mxu0 0
  %170 = vmatprep.subr.bf16.mxu0 0
  %171 = vmatpush1.bf16.msra.mxu0 0
  %172 = vmatprep.subr.bf16.mxu0 0
  %173 = vmatpush1.bf16.msra.mxu0 0
  %174 = vmatprep.subr.bf16.mxu0 0
  %175 = vmatpush1.bf16.msra.mxu0 0
  %176 = vmatprep.subr.bf16.mxu0 0
  %177 = vmatpush1.bf16.msra.mxu0 0
  %178 = vmatprep.subr.bf16.mxu0 0
  %179 = vmatpush1.bf16.msra.mxu0 0
  %180 = vmatprep.subr.bf16.mxu0 0
  %181 = vmatpush1.bf16.msra.mxu0 0
  %182 = vmatprep.mubr.bf16.mxu0 0
  %183 = vmatmul.mubr.bf16.gmra.mrb[0].mxu0 %v78
  %v184 = vpop.f32.mrb[0].mxu0
  %v185 = vadd.f32 %v100, %v184
  %v186 = vpop.f32.mrb[0].mxu0
  %v187 = vpop.f32.mrb[0].mxu0
  %v188 = vpop.f32.mrb[0].mxu0
  %189 = vdwg.mxu0
  %v190 = vmax.f32 %v185, 0.0
  %v191 = vpack.c.bf16 %v190, %v190
  %v192 = vld [vmem:[%s5] sm:$0xf]
  %v193 = vld [vmem:[%s5 + $0x4] sm:$0xf]
  %v194 = vld [vmem:[%s5 + $0x8] sm:$0xf]
  %v195 = vld [vmem:[%s5 + $0xc] sm:$0xf]
  %v196 = vld [vmem:[%s5 + $0x10] sm:$0xf]
  %v197 = vld [vmem:[%s5 + $0x14] sm:$0xf]
  %v198 = vld [vmem:[%s5 + $0x18] sm:$0xf]
  %v199 = vld [vmem:[%s5 + $0x1c] sm:$0xf]
  %v200 = vld [vmem:[%s5 + $0x20] sm:$0xf]
  %v201 = vld [vmem:[%s5 + $0x24] sm:$0xf]
  %v202 = vld [vmem:[%s5 + $0x28] sm:$0xf]
  %v203 = vld [vmem:[%s5 + $0x2c] sm:$0xf]
  %v204 = vld [vmem:[%s5 + $0x30] sm:$0xf]
  %v205 = vld [vmem:[%s5 + $0x34] sm:$0xf]
  %v206 = vld [vmem:[%s5 + $0x38] sm:$0xf]
  %v207 = vld [vmem:[%s5 + $0x3c] sm:$0xf]
  %v208 = vld [vmem:[%s6] sm:$0x1]
  %v210 = vlaneseq
  %v211 = vshrl.u32 %v210, 7
  %v212 = vsub.s32 0, %v211
  %v213 = vrot.slane %v208, %v212
  %v231 = vunpack.c.l.b16 %v192
  %v232 = vunpack.c.l.b16 %v193
  %v233 = vunpack.c.l.b16 %v194
  %v234 = vunpack.c.l.b16 %v195
  %v235 = vunpack.c.l.b16 %v196
  %v236 = vunpack.c.l.b16 %v197
  %v237 = vunpack.c.l.b16 %v198
  %v238 = vunpack.c.l.b16 %v199
  %v239 = vunpack.c.l.b16 %v200
  %v240 = vunpack.c.l.b16 %v201
  %v241 = vunpack.c.l.b16 %v202
  %v242 = vunpack.c.l.b16 %v203
  %v243 = vunpack.c.l.b16 %v204
  %v244 = vunpack.c.l.b16 %v205
  %v245 = vunpack.c.l.b16 %v206
  %v246 = vunpack.c.l.b16 %v207
  %v247 = vpack.c.b16 %v232, %v231
  %v248 = vpack.c.b16 %v234, %v233
  %v249 = vpack.c.b16 %v236, %v235
  %v250 = vpack.c.b16 %v238, %v237
  %v251 = vpack.c.b16 %v240, %v239
  %v252 = vpack.c.b16 %v242, %v241
  %v253 = vpack.c.b16 %v244, %v243
  %v254 = vpack.c.b16 %v246, %v245
  %263 = vmatprep.subr.bf16.mxu0 0
  %264 = vmatpush1.bf16.msra.mxu0 %v247
  %265 = vmatprep.subr.bf16.mxu0 0
  %266 = vmatpush1.bf16.msra.mxu0 %v248
  %267 = vmatprep.subr.bf16.mxu0 0
  %268 = vmatpush1.bf16.msra.mxu0 %v249
  %269 = vmatprep.subr.bf16.mxu0 0
  %270 = vmatpush1.bf16.msra.mxu0 %v250
  %271 = vmatprep.subr.bf16.mxu0 0
  %272 = vmatpush1.bf16.msra.mxu0 %v251
  %273 = vmatprep.subr.bf16.mxu0 0
  %274 = vmatpush1.bf16.msra.mxu0 %v252
  %275 = vmatprep.subr.bf16.mxu0 0
  %276 = vmatpush1.bf16.msra.mxu0 %v253
  %277 = vmatprep.subr.bf16.mxu0 0
  %278 = vmatpush1.bf16.msra.mxu0 %v254
  %279 = vmatprep.subr.bf16.mxu0 0
  %280 = vmatpush1.bf16.msra.mxu0 0
  %281 = vmatprep.subr.bf16.mxu0 0
  %282 = vmatpush1.bf16.msra.mxu0 0
  %283 = vmatprep.subr.bf16.mxu0 0
  %284 = vmatpush1.bf16.msra.mxu0 0
  %285 = vmatprep.subr.bf16.mxu0 0
  %286 = vmatpush1.bf16.msra.mxu0 0
  %287 = vmatprep.subr.bf16.mxu0 0
  %288 = vmatpush1.bf16.msra.mxu0 0
  %289 = vmatprep.subr.bf16.mxu0 0
  %290 = vmatpush1.bf16.msra.mxu0 0
  %291 = vmatprep.subr.bf16.mxu0 0
  %292 = vmatpush1.bf16.msra.mxu0 0
  %293 = vmatprep.subr.bf16.mxu0 0
  %294 = vmatpush1.bf16.msra.mxu0 0
  %295 = vmatprep.mubr.bf16.mxu0 0
  %296 = vmatmul.mubr.bf16.gmra.mrb[0].mxu0 %v191
  %v297 = vpop.f32.mrb[0].mxu0
  %v298 = vadd.f32 %v213, %v297
  %v299 = vpop.f32.mrb[0].mxu0
  %v300 = vpop.f32.mrb[0].mxu0
  %v301 = vpop.f32.mrb[0].mxu0
  %302 = vdwg.mxu0
  %303 = vst [vmem:[%s7] sm:$0xff] %v298
  // Predicated region
  $region30: #{qnet_forward.1} parent=0 // pred_check
    _
  $region31: #{qnet_forward.1} parent=0 // pred_check_branch
    %305 = sbr.rel (0) target = $region33
  $region32: #{qnet_forward.1} parent=0 // pred_region
    _
  $region33: #{qnet_forward.1} parent=0 // pred_fallthru
    _
  // Predicated region
  $region34: #{qnet_forward.1} parent=0 // pred_check
    _
  $region35: #{qnet_forward.1} parent=0 // pred_check_branch
    %307 = sbr.rel (0) target = $region37
  $region36: #{qnet_forward.1} parent=0 // pred_region
    _
  $region37: #{qnet_forward.1} parent=0 // pred_fallthru
    _

</llo_original>
